<compile_context>
chip_gen: v5e
topology: v5e:2x2
jax: 0.10.0
libtpu: 0.0.40
codegen_flags: <defaults>
</compile_context>

<pallas_src>
import functools

import jax
import jax.numpy as jnp
from jax.experimental import pallas as pl
from jax.experimental.pallas import tpu as pltpu


# ---------------------------------------------------------------------------
# Kernel 1: grouped conv (one K = Cig*KH*KW matmul per group, lane-dense
# [Cog, TILE_P] output) fused with per-tile per-channel sum / sum-of-squares.
# ---------------------------------------------------------------------------
def _conv_stats_kernel(xp_ref, w_ref, y_ref, ssum_ref, ssq_ref):
    # xp_ref  : [G, K, TP]   (compute dtype, e.g. bf16)
    # w_ref   : [G, Cog, K]  (compute dtype)
    # y_ref   : [G, Cog, TP] (f32)   ssum_ref/ssq_ref : [G, Cog, 1] (f32)
    G = w_ref.shape[0]
    for g in range(G):                                  # static group loop
        y = jnp.dot(w_ref[g], xp_ref[g],                # [Cog, TP], K=T*Cig
                    preferred_element_type=jnp.float32)
        y_ref[g] = y.astype(y_ref.dtype)
        ssum_ref[g] = jnp.sum(y, axis=-1, keepdims=True)
        ssq_ref[g] = jnp.sum(y * y, axis=-1, keepdims=True)


# ---------------------------------------------------------------------------
# Kernel 2: tiled per-channel affine (folded BatchNorm) + optional ReLU.
# ---------------------------------------------------------------------------
def _affine_relu_kernel(y_ref, scale_ref, bias_ref, o_ref, *, activate):
    y = y_ref[...]                                      # [Cout, TP] f32
    out = y * scale_ref[...] + bias_ref[...]            # scale/bias: [Cout, 1]
    if activate:
        out = jnp.maximum(out, 0.0)
    o_ref[...] = out.astype(o_ref.dtype)


def _pick_tile_p(P, per_p_bytes, budget_bytes=24 << 20):
    """Largest spatial tile that is a multiple of 128, divides P and fits the
    VMEM budget (double-buffered).  Falls back to the full extent when P is not
    a multiple of 128 (the 'full array dim' rule then applies)."""
    if P % 128 != 0:
        return P
    tp = 128
    while (tp * 2) <= P and P % (tp * 2) == 0 and (tp * 2) * per_p_bytes <= budget_bytes:
        tp *= 2
    return tp


def block_forward(x_nchw, weight, gamma, beta, *, stride, padding, groups,
                  eps=1e-5, activate=True, compute_dtype=jnp.bfloat16):
    """weight has PyTorch Conv2d layout [Cout, Cin//groups, KH, KW]."""
    N, Cin, H, W = x_nchw.shape
    Cout, Cig, KH, KW = weight.shape
    G = groups
    assert Cin == Cig * G and Cout % G == 0
    Cog = Cout // G
    s, p = stride, padding
    Hout = (H + 2 * p - KH) // s + 1
    Wout = (W + 2 * p - KW) // s + 1
    T = KH * KW
    K = Cig * T
    P = Hout * Wout

    # --- glue: im2col patches [N, G, K, P], row order k = c*T + (kh*KW + kw)
    #     to match the flattening of the PyTorch weight [Cout, Cig, KH, KW].
    x = x_nchw.astype(compute_dtype)
    xpad = jnp.pad(x, ((0, 0), (0, 0), (p, p), (p, p)))
    taps = []
    for kh in range(KH):
        for kw in range(KW):
            taps.append(xpad[:, :, kh:kh + s * Hout:s, kw:kw + s * Wout:s])
    xp = jnp.stack(taps, axis=2)                        # [N, Cin, T, Hout, Wout]
    xp = xp.reshape(N, G, K, P)                         # channel-major, tap-minor

    w = weight.astype(compute_dtype).reshape(G, Cog, K)  # [G, Cog, K]

    in_bytes = jnp.dtype(compute_dtype).itemsize
    per_p_bytes = 2 * (G * K * in_bytes) + 2 * (Cout * 4)   # dbl-buffered in/out
    TP = _pick_tile_p(P, per_p_bytes)
    nPT = P // TP

    cparams = pltpu.CompilerParams(
        dimension_semantics=("parallel", "parallel"),
        vmem_limit_bytes=48 * 1024 * 1024)

    # --- kernel 1: conv + fused per-channel partial statistics ---
    conv_y, ssum, ssq = pl.pallas_call(
        _conv_stats_kernel,
        out_shape=(
            jax.ShapeDtypeStruct((N, G, Cog, P), jnp.float32),
            jax.ShapeDtypeStruct((N, nPT, G, Cog, 1), jnp.float32),
            jax.ShapeDtypeStruct((N, nPT, G, Cog, 1), jnp.float32),
        ),
        grid=(N, nPT),
        in_specs=[
            pl.BlockSpec((None, G, K, TP), lambda n, t: (n, 0, 0, t)),
            pl.BlockSpec((G, Cog, K), lambda n, t: (0, 0, 0)),
        ],
        out_specs=(
            pl.BlockSpec((None, G, Cog, TP), lambda n, t: (n, 0, 0, t)),
            pl.BlockSpec((None, None, G, Cog, 1), lambda n, t: (n, t, 0, 0, 0)),
            pl.BlockSpec((None, None, G, Cog, 1), lambda n, t: (n, t, 0, 0, 0)),
        ),
        compiler_params=cparams,
    )(xp, w)

    # --- fold batch statistics (training-mode BN, biased variance) ---
    cnt = jnp.float32(N * P)
    s_tot = jnp.sum(ssum.reshape(N * nPT, Cout), axis=0)
    q_tot = jnp.sum(ssq.reshape(N * nPT, Cout), axis=0)
    mean = s_tot / cnt
    var = jnp.maximum(q_tot / cnt - mean * mean, 0.0)
    scale = gamma.astype(jnp.float32) * jax.lax.rsqrt(var + eps)
    bias = beta.astype(jnp.float32) - mean * scale

    # --- kernel 2: tiled affine + ReLU (lane-dense, same tiling) ---
    y_flat = conv_y.reshape(N, Cout, P)                 # free: merges adjacent dims
    out = pl.pallas_call(
        functools.partial(_affine_relu_kernel, activate=activate),
        out_shape=jax.ShapeDtypeStruct((N, Cout, P), jnp.float32),
        grid=(N, nPT),
        in_specs=[
            pl.BlockSpec((None, Cout, TP), lambda n, t: (n, 0, t)),
            pl.BlockSpec((Cout, 1), lambda n, t: (0, 0)),
            pl.BlockSpec((Cout, 1), lambda n, t: (0, 0)),
        ],
        out_specs=pl.BlockSpec((None, Cout, TP), lambda n, t: (n, 0, t)),
        compiler_params=cparams,
    )(y_flat, scale.reshape(Cout, 1), bias.reshape(Cout, 1))

    # channel-major spatial-last layout == NCHW after a free reshape
    return out.reshape(N, Cout, Hout, Wout)


if __name__ == "__main__":
    def run_case(key, N, Cin, H, W, Cout, KH, stride, padding, groups,
                 activate=True, eps=1e-5):
        kx, kw_, kg, kb = jax.random.split(key, 4)
        x = jax.random.normal(kx, (N, Cin, H, W), dtype=jnp.float32)
        fan_in = (Cin // groups) * KH * KH
        weight = jax.random.normal(kw_, (Cout, Cin // groups, KH, KH),
                                   dtype=jnp.float32) / jnp.sqrt(fan_in)
        gamma = 1.0 + 0.1 * jax.random.normal(kg, (Cout,), dtype=jnp.float32)
        beta = 0.1 * jax.random.normal(kb, (Cout,), dtype=jnp.float32)

        out = block_forward(x, weight, gamma, beta, stride=stride,
                            padding=padding, groups=groups, eps=eps,
                            activate=activate)
        out = jax.block_until_ready(out)

        # Reference uses the same bf16 input/weight quantization the kernel
        # carries (with f32 accumulation), so the check isolates kernel math.
        xq = x.astype(jnp.bfloat16).astype(jnp.float32)
        wq = weight.astype(jnp.bfloat16).astype(jnp.float32)
        ref_conv = jax.lax.conv_general_dilated(
            xq, wq, window_strides=(stride, stride),
            padding=[(padding, padding), (padding, padding)],
            dimension_numbers=("NCHW", "OIHW", "NCHW"),
            feature_group_count=groups,
            precision=jax.lax.Precision.HIGHEST)
        m = ref_conv.mean(axis=(0, 2, 3), keepdims=True)
        v = ref_conv.var(axis=(0, 2, 3), keepdims=True)
        ref = (ref_conv - m) / jnp.sqrt(v + eps) * gamma.reshape(1, -1, 1, 1) \
            + beta.reshape(1, -1, 1, 1)
        if activate:
            ref = jnp.maximum(ref, 0.0)

        assert out.shape == ref.shape, (out.shape, ref.shape)
        err = float(jnp.max(jnp.abs(out - ref)))
        assert jnp.allclose(out, ref, atol=1e-2, rtol=1e-2), err

    key = jax.random.PRNGKey(0)
    k1, k2 = jax.random.split(key)
    # block(in_channels=4, out_channels=8, kernel_size=3, stride=1, padding=1,
    #       groups=1, activate=True)
    run_case(k1, N=2, Cin=4, H=16, W=16, Cout=8, KH=3, stride=1, padding=1,
             groups=1)
    # grouped + strided variant exercises the group loop and the P % 128 != 0 path
    run_case(k2, N=2, Cin=4, H=16, W=16, Cout=8, KH=3, stride=2, padding=1,
             groups=2)
    print("KERNEL_OK")
</pallas_src>

<mosaic_0001>
module attributes {stable_mosaic.version = 11 : i64} {
  func.func @_conv_stats_kernel(%arg0: i32, %arg1: i32, %arg2: memref<1x1x36x256xbf16, #tpu.memory_space<vmem>>, %arg3: memref<1x8x36xbf16, #tpu.memory_space<vmem>>, %arg4: memref<1x1x8x256xf32, #tpu.memory_space<vmem>>, %arg5: memref<1x1x1x8x1xf32, #tpu.memory_space<vmem>>, %arg6: memref<1x1x1x8x1xf32, #tpu.memory_space<vmem>>) attributes {dimension_semantics = [#tpu.dimension_semantics<parallel>, #tpu.dimension_semantics<parallel>], iteration_bounds = array<i64: 2, 1>, scalar_prefetch = 0 : i64, scratch_operands = 0 : i64, tpu.core_type = #tpu.core_type<tc>, window_params = [{transform_indices = @transform_0, window_bounds = array<i64: 1, 1, 36, 256>}, {pipeline_mode = #tpu.pipeline_mode<synchronous>, transform_indices = @transform_1, window_bounds = array<i64: 1, 8, 36>}, {transform_indices = @transform_2, window_bounds = array<i64: 1, 1, 8, 256>}, {transform_indices = @transform_3, window_bounds = array<i64: 1, 1, 1, 8, 1>}, {transform_indices = @transform_4, window_bounds = array<i64: 1, 1, 1, 8, 1>}]} {
    %c0 = arith.constant 0 : index
    %c0_0 = arith.constant 0 : index
    %c0_1 = arith.constant 0 : index
    %0 = vector.load %arg3[%c0, %c0_0, %c0_1] : memref<1x8x36xbf16, #tpu.memory_space<vmem>>, vector<1x8x36xbf16>
    %1 = vector.shape_cast %0 : vector<1x8x36xbf16> to vector<8x36xbf16>
    %c0_2 = arith.constant 0 : index
    %c0_3 = arith.constant 0 : index
    %c0_4 = arith.constant 0 : index
    %c0_5 = arith.constant 0 : index
    %2 = vector.load %arg2[%c0_2, %c0_3, %c0_4, %c0_5] : memref<1x1x36x256xbf16, #tpu.memory_space<vmem>>, vector<1x1x36x256xbf16>
    %3 = vector.shape_cast %2 : vector<1x1x36x256xbf16> to vector<36x256xbf16>
    %cst = arith.constant dense<0.000000e+00> : vector<8x256xf32>
    %4 = tpu.matmul %1, %3, %cst {dimension_numbers = #tpu.dot_dimension_numbers<[1], [0], [0], [1], [0, 0, 1, 1], [], []>} : vector<8x36xbf16>, vector<36x256xbf16>, vector<8x256xf32> -> vector<8x256xf32>
    %c0_6 = arith.constant 0 : index
    %c0_7 = arith.constant 0 : index
    %c0_8 = arith.constant 0 : index
    %c0_9 = arith.constant 0 : index
    %5 = vector.load %arg4[%c0_6, %c0_7, %c0_8, %c0_9] : memref<1x1x8x256xf32, #tpu.memory_space<vmem>>, vector<1x1x8x256xf32>
    %6 = vector.shape_cast %5 : vector<1x1x8x256xf32> to vector<8x256xf32>
    %7 = vector.shape_cast %4 : vector<8x256xf32> to vector<1x1x8x256xf32>
    tpu.vector_store %arg4[%c0_6, %c0_7, %c0_8, %c0_9], %7 {strides = array<i32>} : memref<1x1x8x256xf32, #tpu.memory_space<vmem>>, vector<1x1x8x256xf32>,
    %cst_10 = arith.constant dense<0.000000e+00> : vector<8xf32>
    %8 = vector.multi_reduction <add>, %4, %cst_10 [1] : vector<8x256xf32> to vector<8xf32>
    %9 = vector.shape_cast %8 : vector<8xf32> to vector<8x1xf32>
    %c0_11 = arith.constant 0 : index
    %c0_12 = arith.constant 0 : index
    %c0_13 = arith.constant 0 : index
    %c0_14 = arith.constant 0 : index
    %c0_15 = arith.constant 0 : index
    %10 = vector.load %arg5[%c0_11, %c0_12, %c0_13, %c0_14, %c0_15] : memref<1x1x1x8x1xf32, #tpu.memory_space<vmem>>, vector<1x1x1x8x1xf32>
    %11 = vector.shape_cast %10 : vector<1x1x1x8x1xf32> to vector<8x1xf32>
    %12 = vector.shape_cast %9 : vector<8x1xf32> to vector<1x1x1x8x1xf32>
    tpu.vector_store %arg5[%c0_11, %c0_12, %c0_13, %c0_14, %c0_15], %12 {strides = array<i32>} : memref<1x1x1x8x1xf32, #tpu.memory_space<vmem>>, vector<1x1x1x8x1xf32>,
    %13 = arith.mulf %4, %4 : vector<8x256xf32>
    %cst_16 = arith.constant dense<0.000000e+00> : vector<8xf32>
    %14 = vector.multi_reduction <add>, %13, %cst_16 [1] : vector<8x256xf32> to vector<8xf32>
    %15 = vector.shape_cast %14 : vector<8xf32> to vector<8x1xf32>
    %c0_17 = arith.constant 0 : index
    %c0_18 = arith.constant 0 : index
    %c0_19 = arith.constant 0 : index
    %c0_20 = arith.constant 0 : index
    %c0_21 = arith.constant 0 : index
    %16 = vector.load %arg6[%c0_17, %c0_18, %c0_19, %c0_20, %c0_21] : memref<1x1x1x8x1xf32, #tpu.memory_space<vmem>>, vector<1x1x1x8x1xf32>
    %17 = vector.shape_cast %16 : vector<1x1x1x8x1xf32> to vector<8x1xf32>
    %18 = vector.shape_cast %15 : vector<8x1xf32> to vector<1x1x1x8x1xf32>
    tpu.vector_store %arg6[%c0_17, %c0_18, %c0_19, %c0_20, %c0_21], %18 {strides = array<i32>} : memref<1x1x1x8x1xf32, #tpu.memory_space<vmem>>, vector<1x1x1x8x1xf32>,
    return
  }
  func.func @transform_0(%arg0: i32, %arg1: i32) -> (i32, i32, i32, i32) {
    %c0_i32 = arith.constant 0 : i32
    %c0_i32_0 = arith.constant 0 : i32
    %c0_i32_1 = arith.constant 0 : i32
    return %arg0, %c0_i32, %c0_i32_0, %arg1 : i32, i32, i32, i32
  }
  func.func @transform_1(%arg0: i32, %arg1: i32) -> (i32, i32, i32) {
    %c0_i32 = arith.constant 0 : i32
    %c0_i32_0 = arith.constant 0 : i32
    %c0_i32_1 = arith.constant 0 : i32
    %c0_i32_2 = arith.constant 0 : i32
    return %c0_i32, %c0_i32_0, %c0_i32_1 : i32, i32, i32
  }
  func.func @transform_2(%arg0: i32, %arg1: i32) -> (i32, i32, i32, i32) {
    %c0_i32 = arith.constant 0 : i32
    %c0_i32_0 = arith.constant 0 : i32
    %c0_i32_1 = arith.constant 0 : i32
    return %arg0, %c0_i32, %c0_i32_0, %arg1 : i32, i32, i32, i32
  }
  func.func @transform_3(%arg0: i32, %arg1: i32) -> (i32, i32, i32, i32, i32) {
    %c0_i32 = arith.constant 0 : i32
    %c0_i32_0 = arith.constant 0 : i32
    %c0_i32_1 = arith.constant 0 : i32
    %c0_i32_2 = arith.constant 0 : i32
    return %arg0, %arg1, %c0_i32, %c0_i32_0, %c0_i32_1 : i32, i32, i32, i32, i32
  }
  func.func @transform_4(%arg0: i32, %arg1: i32) -> (i32, i32, i32, i32, i32) {
    %c0_i32 = arith.constant 0 : i32
    %c0_i32_0 = arith.constant 0 : i32
    %c0_i32_1 = arith.constant 0 : i32
    %c0_i32_2 = arith.constant 0 : i32
    return %arg0, %arg1, %c0_i32, %c0_i32_0, %c0_i32_1 : i32, i32, i32, i32, i32
  }
}

</mosaic_0001>

<llo_original>
// kernel: tpu_custom_call.1
$region0: #{tpu_custom_call.1}
  #allocation0 [shape = 'u32[]', space=smem, size = 0x4, offset = 0x4, fixed_abs, tag = 'smem constant byte address 0x4 - core index']
  #allocation1 [shape = 'u32[72,128]{1,0:T(1,128)}', space=vmem, size = 0x9000, scoped, tag = 'internal scratch']
  %s0 = inlined_call_operand.vmem [shape: bf16[2,1,36,256], index: 0, kind: input, shape index: {}]
  %s1 = inlined_call_operand.vmem [shape: bf16[1,8,36], index: 1, kind: input, shape index: {}]
  %s2 = inlined_call_operand.hbm [shape: f32[2,1,8,256], index: 2, kind: output, shape index: {0}]
  %s3 = inlined_call_operand.vmem [shape: f32[2,1,1,8,1], index: 3, kind: output, shape index: {1}]
  %s4 = inlined_call_operand.vmem [shape: f32[2,1,1,8,1], index: 4, kind: output, shape index: {2}]
  %5 = xla_tuple %s2, %s3, %s4
  %s6 = sld [smem:[#allocation0]]
  $region57: #{tpu_custom_call.1} parent=0
    _
  %s8 = ssub.s32 1, %s6
  %s9 = scalar_select 0, %s8, %s6
  $region1: #{tpu_custom_call.1} parent=0
    #allocation2 [shape = 'u8[16384]{0}', space=vmem, size = 0x4000, scoped, tag = 'output window, operand 0']
    #allocation3 [shape = 's32[2]{0}', space=sflag, size = 0x8, scoped, tag = 'scoped memory for tpu_custom_call.1']
    %10 = vsyncpa [#allocation3], 0
    %s11 = scalar_lea.sflag [#allocation3], 1
    %12 = vsyncpa %s11, 0
    loop: start=0, step=1, limit=4
    $region2: #{tpu_custom_call.1} parent=1 // loop_pre_header
      _
    $region3: #{tpu_custom_call.1} parent=1 // loop_header
      %s14 = sphi 0, %s18
      %p15 = scmp.ge.s32.totalorder %s14, 4
      %s21 = sphi 0, %s33
      %s22 = sphi 0, %s29
      %s23 = sphi 0, %s21
      %s24 = sphi 0, %s22
      %s25 = sphi 0, %s23
      %s26 = sphi 0, %s24
      %s38 = sphi 0, %s40
      %s41 = sphi 0, %s38
      %s42 = sphi 0, %s41
      %s58 = sphi 0, %s42
      %s62 = sphi 0, %s62
      %s64 = sphi 0, %s62
      %s65 = sphi 0, %s64
      %s79 = sphi 0, %s65
      %s87 = sphi 0, %s89
      %s90 = sphi 0, %s87
      %s91 = sphi 0, %s90
      %s107 = sphi 0, %s91
      %s115 = sphi 0, %s117
      %s118 = sphi 0, %s115
      %s119 = sphi 0, %s118
      %s135 = sphi 0, %s119
      %s143 = sphi 0, %s145
      %s146 = sphi 0, %s143
      %s147 = sphi 0, %s146
      %s163 = sphi 0, %s147
    $region4: #{tpu_custom_call.1} parent=1 // loop_header_branch
      %17 = sbr.rel (%p15) target = $region8
    $region5: #{tpu_custom_call.1} parent=1 // loop_body
      %s19 = ssub.s32 %s14, 1
      %s20 = ssub.s32 %s14, 2
      %s27 = sadd.s32 1, %s22
      %p28 = scmp.ge.s32.totalorder %s27, 1
      %s29 = scalar_select %p28, 0, %s27
      %s30 = sadd.s32 1, %s21
      %s31 = scalar_select %p28, %s30, %s21
      %p32 = scmp.ge.s32.totalorder %s31, 2
      %s33 = scalar_select %p32, 0, %s31
      %s34 = ssub.s32 %s21, %s33
      %s35 = ssub.s32 %s22, %s29
      %s36 = sor.u32 %s34, %s35
      %p37 = scmp.eq.s32.totalorder %s36, 0
      %s39 = sadd.s32 %s38, 1
      %s40 = scalar_select %p37, %s38, %s39
      %p43 = pneg %p37
      %p44 = scmp.eq.s32.totalorder %s14, 1
      %p45 = por %p43, %p44
      %p46 = scmp.ne.s32.totalorder %s38, %s41
      %p47 = scmp.eq.s32.totalorder %s14, 0
      %p48 = por %p46, %p47
      %p49 = scmp.ne.s32.totalorder %s38, %s41
      %p50 = scmp.eq.s32.totalorder %s19, 1
      %p51 = por %p49, %p50
      %p52 = scmp.ne.s32.totalorder %s41, %s42
      %p53 = scmp.eq.s32.totalorder %s19, 0
      %p54 = por %p52, %p53
      %p55 = scmp.ne.s32.totalorder %s41, %s42
      %p56 = scmp.eq.s32.totalorder %s20, 1
      %p57 = por %p55, %p56
      %p59 = scmp.ne.s32.totalorder %s42, %s58
      %p60 = scmp.eq.s32.totalorder %s20, 0
      %p61 = por %p59, %p60
      %s63 = sadd.s32 %s62, 1
      %p66 = scmp.eq.s32.totalorder %s14, 1
      %p67 = scmp.ne.s32.totalorder %s62, %s64
      %p68 = scmp.eq.s32.totalorder %s14, 0
      %p69 = por %p67, %p68
      %p70 = scmp.ne.s32.totalorder %s62, %s64
      %p71 = scmp.eq.s32.totalorder %s19, 1
      %p72 = por %p70, %p71
      %p73 = scmp.ne.s32.totalorder %s64, %s65
      %p74 = scmp.eq.s32.totalorder %s19, 0
      %p75 = por %p73, %p74
      %p76 = scmp.ne.s32.totalorder %s64, %s65
      %p77 = scmp.eq.s32.totalorder %s20, 1
      %p78 = por %p76, %p77
      %p80 = scmp.ne.s32.totalorder %s65, %s79
      %p81 = scmp.eq.s32.totalorder %s20, 0
      %p82 = por %p80, %p81
      %s83 = ssub.s32 %s21, %s33
      %s84 = ssub.s32 %s22, %s29
      %s85 = sor.u32 %s83, %s84
      %p86 = scmp.eq.s32.totalorder %s85, 0
      %s88 = sadd.s32 %s87, 1
      %s89 = scalar_select %p86, %s87, %s88
      %p92 = pneg %p86
      %p93 = scmp.eq.s32.totalorder %s14, 1
      %p94 = por %p92, %p93
      %p95 = scmp.ne.s32.totalorder %s87, %s90
      %p96 = scmp.eq.s32.totalorder %s14, 0
      %p97 = por %p95, %p96
      %p98 = scmp.ne.s32.totalorder %s87, %s90
      %p99 = scmp.eq.s32.totalorder %s19, 1
      %p100 = por %p98, %p99
      %p101 = scmp.ne.s32.totalorder %s90, %s91
      %p102 = scmp.eq.s32.totalorder %s19, 0
      %p103 = por %p101, %p102
      %p104 = scmp.ne.s32.totalorder %s90, %s91
      %p105 = scmp.eq.s32.totalorder %s20, 1
      %p106 = por %p104, %p105
      %p108 = scmp.ne.s32.totalorder %s91, %s107
      %p109 = scmp.eq.s32.totalorder %s20, 0
      %p110 = por %p108, %p109
      %s111 = ssub.s32 %s21, %s33
      %s112 = ssub.s32 %s22, %s29
      %s113 = sor.u32 %s111, %s112
      %p114 = scmp.eq.s32.totalorder %s113, 0
      %s116 = sadd.s32 %s115, 1
      %s117 = scalar_select %p114, %s115, %s116
      %p120 = pneg %p114
      %p121 = scmp.eq.s32.totalorder %s14, 1
      %p122 = por %p120, %p121
      %p123 = scmp.ne.s32.totalorder %s115, %s118
      %p124 = scmp.eq.s32.totalorder %s14, 0
      %p125 = por %p123, %p124
      %p126 = scmp.ne.s32.totalorder %s115, %s118
      %p127 = scmp.eq.s32.totalorder %s19, 1
      %p128 = por %p126, %p127
      %p129 = scmp.ne.s32.totalorder %s118, %s119
      %p130 = scmp.eq.s32.totalorder %s19, 0
      %p131 = por %p129, %p130
      %p132 = scmp.ne.s32.totalorder %s118, %s119
      %p133 = scmp.eq.s32.totalorder %s20, 1
      %p134 = por %p132, %p133
      %p136 = scmp.ne.s32.totalorder %s119, %s135
      %p137 = scmp.eq.s32.totalorder %s20, 0
      %p138 = por %p136, %p137
      %s139 = ssub.s32 %s21, %s33
      %s140 = ssub.s32 %s22, %s29
      %s141 = sor.u32 %s139, %s140
      %p142 = scmp.eq.s32.totalorder %s141, 0
      %s144 = sadd.s32 %s143, 1
      %s145 = scalar_select %p142, %s143, %s144
      %p148 = pneg %p142
      %p149 = scmp.eq.s32.totalorder %s14, 1
      %p150 = por %p148, %p149
      %p151 = scmp.ne.s32.totalorder %s143, %s146
      %p152 = scmp.eq.s32.totalorder %s14, 0
      %p153 = por %p151, %p152
      %p154 = scmp.ne.s32.totalorder %s143, %s146
      %p155 = scmp.eq.s32.totalorder %s19, 1
      %p156 = por %p154, %p155
      %p157 = scmp.ne.s32.totalorder %s146, %s147
      %p158 = scmp.eq.s32.totalorder %s19, 0
      %p159 = por %p157, %p158
      %p160 = scmp.ne.s32.totalorder %s146, %s147
      %p161 = scmp.eq.s32.totalorder %s20, 1
      %p162 = por %p160, %p161
      %p164 = scmp.ne.s32.totalorder %s147, %s163
      %p165 = scmp.eq.s32.totalorder %s20, 0
      %p166 = por %p164, %p165
      %p167 = scmp.le.s32.totalorder 1, %s14
      %p168 = scmp.lt.s32.totalorder %s14, 3
      %p169 = pnand %p167, %p168
      %p170 = pneg %p169
      // Predicated region
      $region9: #{tpu_custom_call.1} parent=5 // pred_check
        _
      $region10: #{tpu_custom_call.1} parent=5 // pred_check_branch
        %172 = sbr.rel (%p169) target = $region12
      $region11: #{tpu_custom_call.1} parent=5 // pred_region
        %s173 = ssub.s32 %s14, 1
        // Predicated region
        $region13: #{tpu_custom_call.1} parent=11 // pred_check
          %p174 = pneg %p75
        $region14: #{tpu_custom_call.1} parent=11 // pred_check_branch
          %176 = sbr.rel (%p174) target = $region16
        $region15: #{tpu_custom_call.1} parent=11 // pred_region
          _
        $region16: #{tpu_custom_call.1} parent=11 // pred_fallthru
          _
      $region12: #{tpu_custom_call.1} parent=5 // pred_fallthru
        _
      %p177 = scmp.lt.s32.totalorder %s14, 2
      // Predicated region
      $region17: #{tpu_custom_call.1} parent=5 // pred_check
        %p178 = pneg %p177
      $region18: #{tpu_custom_call.1} parent=5 // pred_check_branch
        %180 = sbr.rel (%p178) target = $region20
      $region19: #{tpu_custom_call.1} parent=5 // pred_region
        // Predicated region
        $region21: #{tpu_custom_call.1} parent=19 // pred_check
          %p181 = pneg %p48
        $region22: #{tpu_custom_call.1} parent=19 // pred_check_branch
          %183 = sbr.rel (%p181) target = $region24
        $region23: #{tpu_custom_call.1} parent=19 // pred_region
          %s184 = smul.u32 2, %s22
          %p185 = scmp.lt.s32.totalorder %s21, 1
          %s186 = scalar_select %p185, %s21, 1
          %p187 = scmp.lt.s32.totalorder %s184, 1
          %s188 = scalar_select %p187, %s184, 1
          %s189 = smul.addr %s186, 10
          %s190 = sadd.s32 %s188, %s189
          %s191 = smul.addr %s190, 4
          %s192 = scalar_lea.vmem %s0, %s191
          %s193 = smul.u32 2, %s22
        $region24: #{tpu_custom_call.1} parent=19 // pred_fallthru
          _
      $region20: #{tpu_custom_call.1} parent=5 // pred_fallthru
        _
      %p194 = scmp.le.s32.totalorder 1, %s14
      %p195 = scmp.lt.s32.totalorder %s14, 3
      %p196 = pnand %p194, %p195
      %p197 = pneg %p196
      // Predicated region
      $region25: #{tpu_custom_call.1} parent=5 // pred_check
        _
      $region26: #{tpu_custom_call.1} parent=5 // pred_check_branch
        %199 = sbr.rel (%p196) target = $region28
      $region27: #{tpu_custom_call.1} parent=5 // pred_region
        %s200 = ssub.s32 %s14, 1
        %s201 = smul.u32 2, %s24
        %p202 = scmp.lt.s32.totalorder %s23, 1
        %s203 = scalar_select %p202, %s23, 1
        %p204 = scmp.lt.s32.totalorder %s201, 1
        %s205 = scalar_select %p204, %s201, 1
        %s206 = smul.addr %s203, 10
        %s207 = sadd.s32 %s205, %s206
        %s208 = smul.addr %s207, 4
        %s209 = scalar_lea.vmem %s0, %s208
        %p210 = pneg %p54
        %p211 = pneg %p51
        %p212 = pneg %p75
        %p213 = pneg %p72
        %p214 = pneg %p103
        %p215 = pneg %p100
        %s216 = sand.u32 %s90, 1
        %s217 = scalar_lea.sflag [#allocation3], %s216
        %s218 = sand.u32 %s90, 1
        %s219 = smul.addr %s218, 16
        %s220 = scalar_lea.vmem [#allocation2], %s219
        %p221 = pneg %p131
        %p222 = pneg %p128
        %p223 = scmp.lt.s32.totalorder %s23, 1
        %s224 = scalar_select %p223, %s23, 1
        %p225 = scmp.lt.s32.totalorder %s24, 0
        %s226 = scalar_select %p225, %s24, 0
        %s227 = sadd.s32 %s226, %s224
        %s228 = smul.addr %s227, 8
        %s229 = scalar_lea.vmem %s3, %s228
        %p230 = pneg %p159
        %p231 = pneg %p156
        %p232 = scmp.lt.s32.totalorder %s23, 1
        %s233 = scalar_select %p232, %s23, 1
        %p234 = scmp.lt.s32.totalorder %s24, 0
        %s235 = scalar_select %p234, %s24, 0
        %s236 = sadd.s32 %s235, %s233
        %s237 = smul.addr %s236, 8
        %s238 = scalar_lea.vmem %s4, %s237
        %s239 = smul.u32 2, %s24
        %p240 = scmp.lt.s32.totalorder %s23, 1
        %s241 = scalar_select %p240, %s23, 1
        %p242 = scmp.lt.s32.totalorder %s239, 1
        %s243 = scalar_select %p242, %s239, 1
        %s244 = smul.addr %s241, 10
        %s245 = sadd.s32 %s243, %s244
        %s246 = smul.addr %s245, 4
        %s247 = scalar_lea.vmem %s0, %s246
        %s248 = smul.u32 2, %s24
        %s249 = smul.u32 2, %s24
        %p250 = scmp.lt.s32.totalorder %s23, 1
        %s251 = scalar_select %p250, %s23, 1
        %p252 = scmp.lt.s32.totalorder %s24, 0
        %s253 = scalar_select %p252, %s24, 0
        %s254 = sadd.s32 %s253, %s251
        %s255 = smul.addr %s254, 8
        %s256 = scalar_lea.vmem %s3, %s255
        %p257 = scmp.lt.s32.totalorder %s23, 1
        %s258 = scalar_select %p257, %s23, 1
        %p259 = scmp.lt.s32.totalorder %s24, 0
        %s260 = scalar_select %p259, %s24, 0
        %s261 = sadd.s32 %s260, %s258
        %s262 = smul.addr %s261, 8
        %s263 = scalar_lea.vmem %s4, %s262
        %v265 = vld [vmem:[%s1] sm:$0xf]
        %v266 = vld [vmem:[%s247] sm:$0xff]
        %v267 = vld [vmem:[%s247 + $0x8] sm:$0xff]
        %v268 = vld [vmem:[%s247 + $0x10] sm:$0xff]
        %v269 = vld [vmem:[%s247 + $0x18] sm:$0xff]
        %v270 = vld [vmem:[%s247 + $0x20] sm:$0x33]
        %v276 = vunpack.c.l.b16 %v266
        %v277 = vunpack.c.h.b16 %v266
        %v278 = vunpack.c.l.b16 %v267
        %v279 = vunpack.c.h.b16 %v267
        %v280 = vunpack.c.l.b16 %v268
        %v281 = vunpack.c.h.b16 %v268
        %v282 = vunpack.c.l.b16 %v269
        %v283 = vunpack.c.h.b16 %v269
        %v284 = vunpack.c.l.b16 %v270
        %v285 = vunpack.c.h.b16 %v270
        %v286 = vpack.c.b16 %v278, %v276
        %v287 = vpack.c.b16 %v279, %v277
        %v288 = vpack.c.b16 %v282, %v280
        %v289 = vpack.c.b16 %v283, %v281
        %v290 = vpack.c.b16 %v284, %v284
        %v291 = vpack.c.b16 %v285, %v285
        %vm296 = vcmask 293888
        %v298 = vsel %vm296, %v265, 0
        %vm300 = vcmask 1041408
        %v302 = vsel %vm300, %v290, 0
        %v305 = vsel %vm300, %v291, 0
        %307 = vmatpush.bf16.msra.mxu0 0
        %308 = vmatpush.bf16.msra.mxu0 0
        %309 = vmatpush.bf16.msra.mxu0 0
        %310 = vmatpush.bf16.msra.mxu0 0
        %311 = vmatpush.bf16.msra.mxu0 0
        %312 = vmatpush.bf16.msra.mxu0 %v302
        %313 = vmatpush.bf16.msra.mxu0 %v288
        %314 = vmatpush.bf16.msra.mxu0 %v286
        %315 = vmatmul.bf16.gmra.mxu0 %v298
        %v316 = vpop.f32.mrf.mxu0
        %v317 = vadd.f32 0.0, %v316
        %v318 = vpop.f32.mrf.mxu0
        %319 = vdwg.mxu0
        %320 = vmatpush.bf16.msra.mxu0 0
        %321 = vmatpush.bf16.msra.mxu0 0
        %322 = vmatpush.bf16.msra.mxu0 0
        %323 = vmatpush.bf16.msra.mxu0 0
        %324 = vmatpush.bf16.msra.mxu0 0
        %325 = vmatpush.bf16.msra.mxu0 %v305
        %326 = vmatpush.bf16.msra.mxu0 %v289
        %327 = vmatpush.bf16.msra.mxu0 %v287
        %328 = vmatmul.bf16.gmra.mxu0 %v298
        %v329 = vpop.f32.mrf.mxu0
        %v330 = vadd.f32 0.0, %v329
        %v331 = vpop.f32.mrf.mxu0
        %332 = vdwg.mxu0
        %333 = vst [vmem:[%s220] sm:$0xff] %v317
        %334 = vst [vmem:[%s220 + $0x8] sm:$0xff] %v330
        %v335 = vadd.f32 %v317, %v330
        %336 = vadd.xlane.f32.xlu0 %v335
        %v337 = vpop.xlane.xlu0 %336
        %vm338 = vcmask 7168
        %339 = vst.msk [vmem:[%s256] sm:$0xff] %vm338, %v337
        %v340 = vmul.f32 %v317, %v317
        %v341 = vmul.f32 %v330, %v330
        %v342 = vadd.f32 %v340, %v341
        %343 = vadd.xlane.f32.xlu0 %v342
        %v344 = vpop.xlane.xlu0 %343
        %345 = vst.msk [vmem:[%s263] sm:$0xff] %vm338, %v344
        %s346 = sand.u32 %s90, 1
        %s347 = scalar_lea.sflag [#allocation3], %s346
        %s348 = sand.u32 %s90, 1
        %s349 = smul.addr %s348, 16
        %s350 = scalar_lea.vmem [#allocation2], %s349
        %p351 = scmp.lt.s32.totalorder %s23, 1
        %s352 = scalar_select %p351, %s23, 1
        %p353 = scmp.lt.s32.totalorder %s24, 0
        %s354 = scalar_select %p353, %s24, 0
        %s355 = sadd.s32 %s354, %s352
        %s356 = smul.addr %s355, 8
        %s357 = scalar_lea.vmem %s3, %s356
        %p358 = scmp.lt.s32.totalorder %s23, 1
        %s359 = scalar_select %p358, %s23, 1
        %p360 = scmp.lt.s32.totalorder %s24, 0
        %s361 = scalar_select %p360, %s24, 0
        %s362 = sadd.s32 %s361, %s359
        %s363 = smul.addr %s362, 8
        %s364 = scalar_lea.vmem %s4, %s363
        // Predicated region
        $region29: #{tpu_custom_call.1} parent=27 // pred_check
          %p365 = pneg %p100
        $region30: #{tpu_custom_call.1} parent=27 // pred_check_branch
          %367 = sbr.rel (%p365) target = $region32
        $region31: #{tpu_custom_call.1} parent=27 // pred_region
          %s368 = smul.u32 2, %s24
          %370 = vsyncadd %s347, 0
          %s371 = smul.addr %s23, 2
          %s372 = sadd.s32 %s368, %s371
          %s373 = smul.addr %s372, 8
          %s374 = scalar_lea.hbm %s2, %s373
          %s376 = sshll.u32 %s350, 4
          %s377 = int_to_ptr.vmem [resolvable:$true] %s376
          %s378 = sshll.u32 %s374, 4
          %s379 = int_to_ptr.hbm [resolvable:$true] %s378
          %381 = dma.vmem_to_hbm [thread:$0]  %s377, 256, %s379, %s347
        $region32: #{tpu_custom_call.1} parent=27 // pred_fallthru
          _
        // Predicated region
        $region33: #{tpu_custom_call.1} parent=27 // pred_check
          %p382 = pneg %p128
        $region34: #{tpu_custom_call.1} parent=27 // pred_check_branch
          %384 = sbr.rel (%p382) target = $region36
        $region35: #{tpu_custom_call.1} parent=27 // pred_region
          _
        $region36: #{tpu_custom_call.1} parent=27 // pred_fallthru
          _
        // Predicated region
        $region37: #{tpu_custom_call.1} parent=27 // pred_check
          %p385 = pneg %p156
        $region38: #{tpu_custom_call.1} parent=27 // pred_check_branch
          %387 = sbr.rel (%p385) target = $region40
        $region39: #{tpu_custom_call.1} parent=27 // pred_region
          _
        $region40: #{tpu_custom_call.1} parent=27 // pred_fallthru
          _
      $region28: #{tpu_custom_call.1} parent=5 // pred_fallthru
        _
      %p388 = scmp.le.s32.totalorder 2, %s14
      // Predicated region
      $region41: #{tpu_custom_call.1} parent=5 // pred_check
        %p389 = pneg %p388
      $region42: #{tpu_custom_call.1} parent=5 // pred_check_branch
        %391 = sbr.rel (%p389) target = $region44
      $region43: #{tpu_custom_call.1} parent=5 // pred_region
        %s392 = ssub.s32 %s14, 2
        // Predicated region
        $region45: #{tpu_custom_call.1} parent=43 // pred_check
          %p393 = pneg %p106
        $region46: #{tpu_custom_call.1} parent=43 // pred_check_branch
          %395 = sbr.rel (%p393) target = $region48
        $region47: #{tpu_custom_call.1} parent=43 // pred_region
          %s396 = sand.u32 %s91, 1
          %s397 = scalar_lea.sflag [#allocation3], %s396
          %s398 = sand.u32 %s91, 1
          %s399 = smul.addr %s398, 16
          %s400 = scalar_lea.vmem [#allocation2], %s399
          %402 = dma.done %s397, 256
        $region48: #{tpu_custom_call.1} parent=43 // pred_fallthru
          _
        // Predicated region
        $region49: #{tpu_custom_call.1} parent=43 // pred_check
          %p403 = pneg %p134
        $region50: #{tpu_custom_call.1} parent=43 // pred_check_branch
          %405 = sbr.rel (%p403) target = $region52
        $region51: #{tpu_custom_call.1} parent=43 // pred_region
          %p406 = scmp.lt.s32.totalorder %s25, 1
          %s407 = scalar_select %p406, %s25, 1
          %p408 = scmp.lt.s32.totalorder %s26, 0
          %s409 = scalar_select %p408, %s26, 0
          %s410 = sadd.s32 %s409, %s407
          %s411 = smul.addr %s410, 8
          %s412 = scalar_lea.vmem %s3, %s411
        $region52: #{tpu_custom_call.1} parent=43 // pred_fallthru
          _
        // Predicated region
        $region53: #{tpu_custom_call.1} parent=43 // pred_check
          %p413 = pneg %p162
        $region54: #{tpu_custom_call.1} parent=43 // pred_check_branch
          %415 = sbr.rel (%p413) target = $region56
        $region55: #{tpu_custom_call.1} parent=43 // pred_region
          %p416 = scmp.lt.s32.totalorder %s25, 1
          %s417 = scalar_select %p416, %s25, 1
          %p418 = scmp.lt.s32.totalorder %s26, 0
          %s419 = scalar_select %p418, %s26, 0
          %s420 = sadd.s32 %s419, %s417
          %s421 = smul.addr %s420, 8
          %s422 = scalar_lea.vmem %s4, %s421
        $region56: #{tpu_custom_call.1} parent=43 // pred_fallthru
          _
      $region44: #{tpu_custom_call.1} parent=5 // pred_fallthru
        _
    $region6: #{tpu_custom_call.1} parent=1 // loop_footer
      %s18 = sadd.s32 1, %s14
    $region7: #{tpu_custom_call.1} parent=1 // loop_footer_branch
      %13 = sbr.rel target = $region3
    $region8: #{tpu_custom_call.1} parent=1 // loop_exit
      _
    %423 = vsyncpa [#allocation3], 1
    %s424 = scalar_lea.sflag [#allocation3], 1
    %425 = vsyncpa %s424, 1

</llo_original>
